<compile_context>
chip_gen: v7x
topology: tpu7x:2x2x1
jax: 0.10.0
libtpu: 0.0.40
codegen_flags: <defaults>
</compile_context>

<pallas_src>
import functools

import jax
import jax.numpy as jnp
from jax.experimental import pallas as pl
from jax.experimental.pallas import tpu as pltpu

WIDTH = 256
SUBLANE_BF16 = 16   # keep batch-tile rows a multiple of the bf16 sublane pack


def _round_up(x: int, m: int) -> int:
    return ((x + m - 1) // m) * m


def _mlp_kernel(x_ref,
                w1_ref, b1_ref,
                w2_ref, b2_ref,
                w3_ref, b3_ref,
                w4_ref, b4_ref,
                w5_ref, b5_ref,
                wf_ref, bf_ref,
                o_ref):
    """Fused 6-layer MLP on one (tm, input_size) fp32 activation tile."""

    def linear(h_bf16, w_ref, b_ref):
        # bf16 MXU operands, fp32 accumulation, fp32 (1, N) bias broadcast-add.
        acc = jnp.dot(h_bf16, w_ref[...], preferred_element_type=jnp.float32)
        return acc + b_ref[...]

    h = x_ref[...].astype(jnp.bfloat16)               # fp32 -> bf16 in VMEM
    for w_ref, b_ref in ((w1_ref, b1_ref), (w2_ref, b2_ref), (w3_ref, b3_ref),
                         (w4_ref, b4_ref), (w5_ref, b5_ref)):
        h = jnp.maximum(linear(h, w_ref, b_ref), 0.0).astype(jnp.bfloat16)
    o_ref[...] = linear(h, wf_ref, bf_ref)            # fp32, no ReLU


def prepare_params(params):
    """One-time (outside the serving loop): bf16 weights, fp32 biases."""
    prepared = {}
    for name in ("1", "2", "3", "4", "5", "f"):
        prepared[f"w{name}"] = params[f"w{name}"].astype(jnp.bfloat16)
        prepared[f"b{name}"] = params[f"b{name}"].astype(jnp.float32)
    return prepared


@functools.partial(jax.jit, static_argnames=("tm",))
def simple_nn_forward(x, prepared, *, tm=512):
    """x: (B, input_size) float32; prepared: output of prepare_params()."""
    batch, input_size = x.shape
    output_size = prepared["wf"].shape[1]

    # Batch-tile rows: large (amortize per-grid-step overhead), but
    #  - never over-pad a tiny batch, and
    #  - keep >=2 grid steps when the batch can be split, so "parallel"
    #    semantics can shard across v7x's two TensorCores.
    tm = min(tm, _round_up(batch, SUBLANE_BF16))
    tm = min(tm, _round_up(pl.cdiv(batch, 2), SUBLANE_BF16))
    tm = max(tm, SUBLANE_BF16)
    b_pad = _round_up(batch, tm)

    # Only row-pad x when batch is not a multiple of tm (padded rows compute
    # ReLU(bias) and are sliced off below — harmless, and at most tm-1 rows).
    xp = x if b_pad == batch else jnp.pad(x, ((0, b_pad - batch), (0, 0)))

    args = (xp,
            prepared["w1"], prepared["b1"],
            prepared["w2"], prepared["b2"],
            prepared["w3"], prepared["b3"],
            prepared["w4"], prepared["b4"],
            prepared["w5"], prepared["b5"],
            prepared["wf"], prepared["bf"])

    def resident(shape):
        # Full-array block whose block index never changes: fetched once,
        # stays VMEM-resident across all batch tiles.
        return pl.BlockSpec(shape, lambda i: (0, 0))

    in_specs = [pl.BlockSpec((tm, input_size), lambda i: (i, 0))]
    in_specs += [resident(a.shape) for a in args[1:]]
    out_specs = pl.BlockSpec((tm, output_size), lambda i: (i, 0))

    flops = 2 * b_pad * (input_size * WIDTH + 4 * WIDTH * WIDTH
                         + WIDTH * output_size)
    bytes_accessed = (sum(int(a.size) * a.dtype.itemsize for a in args)
                      + b_pad * output_size * 4)

    out = pl.pallas_call(
        _mlp_kernel,
        out_shape=jax.ShapeDtypeStruct((b_pad, output_size), jnp.float32),
        grid=(b_pad // tm,),
        in_specs=in_specs,
        out_specs=out_specs,
        compiler_params=pltpu.CompilerParams(
            dimension_semantics=("parallel",)),
        cost_estimate=pl.CostEstimate(
            flops=int(flops), transcendentals=0,
            bytes_accessed=int(bytes_accessed)),
    )(*args)

    return out if b_pad == batch else out[:batch]


def init_params(key, input_size, output_size):
    """Deterministic init mirroring nn.Linear's U(-1/sqrt(fan_in), 1/sqrt(fan_in))."""
    dims = [(input_size, WIDTH), (WIDTH, WIDTH), (WIDTH, WIDTH),
            (WIDTH, WIDTH), (WIDTH, WIDTH), (WIDTH, output_size)]
    names = ["1", "2", "3", "4", "5", "f"]
    params = {}
    for name, (fan_in, fan_out) in zip(names, dims):
        key, kw, kb = jax.random.split(key, 3)
        bound = 1.0 / (fan_in ** 0.5)
        params[f"w{name}"] = jax.random.uniform(
            kw, (fan_in, fan_out), jnp.float32, -bound, bound)
        params[f"b{name}"] = jax.random.uniform(
            kb, (1, fan_out), jnp.float32, -bound, bound)
    return params


def reference_forward_f32(x, params):
    h = x
    for name in ["1", "2", "3", "4", "5"]:
        h = jnp.maximum(h @ params[f"w{name}"] + params[f"b{name}"], 0.0)
    return h @ params["wf"] + params["bf"]


def reference_forward_bf16(x, params):
    """Same precision recipe as the kernel: bf16 operands, fp32 accum, fp32 bias."""
    h = x.astype(jnp.bfloat16)
    for name in ["1", "2", "3", "4", "5"]:
        w = params[f"w{name}"].astype(jnp.bfloat16)
        b = params[f"b{name}"].astype(jnp.float32)
        h = jnp.maximum(
            jnp.dot(h, w, preferred_element_type=jnp.float32) + b, 0.0
        ).astype(jnp.bfloat16)
    wf = params["wf"].astype(jnp.bfloat16)
    bf = params["bf"].astype(jnp.float32)
    return jnp.dot(h, wf, preferred_element_type=jnp.float32) + bf


if __name__ == "__main__":
    key = jax.random.PRNGKey(0)
    batch, input_size, output_size = 8, 32, 8

    kx, kp = jax.random.split(key)
    x = jax.random.normal(kx, (batch, input_size), jnp.float32)
    params = init_params(kp, input_size, output_size)
    prepared = prepare_params(params)   # one-time weight cast, outside the loop

    out = jax.block_until_ready(simple_nn_forward(x, prepared))
    ref_bf16 = jax.block_until_ready(reference_forward_bf16(x, params))
    ref_f32 = jax.block_until_ready(reference_forward_f32(x, params))

    assert out.shape == (batch, output_size), out.shape
    # Matches the bf16/fp32-accum recipe tightly ...
    assert jnp.allclose(out, ref_bf16, atol=1e-2, rtol=1e-2), \
        float(jnp.max(jnp.abs(out - ref_bf16)))
    # ... and the pure fp32 reference within bf16 quantization error.
    assert jnp.allclose(out, ref_f32, atol=5e-2, rtol=5e-2), \
        float(jnp.max(jnp.abs(out - ref_f32)))
    print("KERNEL_OK")
</pallas_src>

<mosaic_0001>
module attributes {stable_mosaic.version = 11 : i64} {
  func.func @_mlp_kernel(%arg0: i32, %arg1: memref<16x32xf32, #tpu.memory_space<vmem>>, %arg2: memref<32x256xbf16, #tpu.memory_space<vmem>>, %arg3: memref<1x256xf32, #tpu.memory_space<vmem>>, %arg4: memref<256x256xbf16, #tpu.memory_space<vmem>>, %arg5: memref<1x256xf32, #tpu.memory_space<vmem>>, %arg6: memref<256x256xbf16, #tpu.memory_space<vmem>>, %arg7: memref<1x256xf32, #tpu.memory_space<vmem>>, %arg8: memref<256x256xbf16, #tpu.memory_space<vmem>>, %arg9: memref<1x256xf32, #tpu.memory_space<vmem>>, %arg10: memref<256x256xbf16, #tpu.memory_space<vmem>>, %arg11: memref<1x256xf32, #tpu.memory_space<vmem>>, %arg12: memref<256x8xbf16, #tpu.memory_space<vmem>>, %arg13: memref<1x8xf32, #tpu.memory_space<vmem>>, %arg14: memref<16x8xf32, #tpu.memory_space<vmem>>) attributes {dimension_semantics = [#tpu.dimension_semantics<parallel>], iteration_bounds = array<i64: 1>, scalar_prefetch = 0 : i64, scratch_operands = 0 : i64, tpu.core_type = #tpu.core_type<tc>, window_params = [{transform_indices = @transform_0, window_bounds = array<i64: 16, 32>}, {pipeline_mode = #tpu.pipeline_mode<synchronous>, transform_indices = @transform_1, window_bounds = array<i64: 32, 256>}, {pipeline_mode = #tpu.pipeline_mode<synchronous>, transform_indices = @transform_2, window_bounds = array<i64: 1, 256>}, {pipeline_mode = #tpu.pipeline_mode<synchronous>, transform_indices = @transform_3, window_bounds = array<i64: 256, 256>}, {pipeline_mode = #tpu.pipeline_mode<synchronous>, transform_indices = @transform_4, window_bounds = array<i64: 1, 256>}, {pipeline_mode = #tpu.pipeline_mode<synchronous>, transform_indices = @transform_5, window_bounds = array<i64: 256, 256>}, {pipeline_mode = #tpu.pipeline_mode<synchronous>, transform_indices = @transform_6, window_bounds = array<i64: 1, 256>}, {pipeline_mode = #tpu.pipeline_mode<synchronous>, transform_indices = @transform_7, window_bounds = array<i64: 256, 256>}, {pipeline_mode = #tpu.pipeline_mode<synchronous>, transform_indices = @transform_8, window_bounds = array<i64: 1, 256>}, {pipeline_mode = #tpu.pipeline_mode<synchronous>, transform_indices = @transform_9, window_bounds = array<i64: 256, 256>}, {pipeline_mode = #tpu.pipeline_mode<synchronous>, transform_indices = @transform_10, window_bounds = array<i64: 1, 256>}, {pipeline_mode = #tpu.pipeline_mode<synchronous>, transform_indices = @transform_11, window_bounds = array<i64: 256, 8>}, {pipeline_mode = #tpu.pipeline_mode<synchronous>, transform_indices = @transform_12, window_bounds = array<i64: 1, 8>}, {transform_indices = @transform_13, window_bounds = array<i64: 16, 8>}]} {
    %c0 = arith.constant 0 : index
    %c0_0 = arith.constant 0 : index
    %0 = vector.load %arg1[%c0, %c0_0] : memref<16x32xf32, #tpu.memory_space<vmem>>, vector<16x32xf32>
    %1 = arith.truncf %0 : vector<16x32xf32> to vector<16x32xbf16>
    %c0_1 = arith.constant 0 : index
    %c0_2 = arith.constant 0 : index
    %2 = vector.load %arg2[%c0_1, %c0_2] : memref<32x256xbf16, #tpu.memory_space<vmem>>, vector<32x256xbf16>
    %cst = arith.constant dense<0.000000e+00> : vector<16x256xf32>
    %3 = tpu.matmul %1, %2, %cst {dimension_numbers = #tpu.dot_dimension_numbers<[1], [0], [0], [1], [0, 0, 1, 1], [], []>} : vector<16x32xbf16>, vector<32x256xbf16>, vector<16x256xf32> -> vector<16x256xf32>
    %c0_3 = arith.constant 0 : index
    %c0_4 = arith.constant 0 : index
    %4 = vector.load %arg3[%c0_3, %c0_4] : memref<1x256xf32, #tpu.memory_space<vmem>>, vector<1x256xf32>
    %5 = vector.broadcast %4 : vector<1x256xf32> to vector<16x256xf32>
    %6 = arith.addf %3, %5 : vector<16x256xf32>
    %cst_5 = arith.constant 0.000000e+00 : f32
    %7 = vector.broadcast %cst_5 : f32 to vector<16x256xf32>
    %8 = arith.maximumf %6, %7 : vector<16x256xf32>
    %9 = arith.truncf %8 : vector<16x256xf32> to vector<16x256xbf16>
    %c0_6 = arith.constant 0 : index
    %c0_7 = arith.constant 0 : index
    %10 = vector.load %arg4[%c0_6, %c0_7] : memref<256x256xbf16, #tpu.memory_space<vmem>>, vector<256x256xbf16>
    %cst_8 = arith.constant dense<0.000000e+00> : vector<16x256xf32>
    %11 = tpu.matmul %9, %10, %cst_8 {dimension_numbers = #tpu.dot_dimension_numbers<[1], [0], [0], [1], [0, 0, 1, 1], [], []>} : vector<16x256xbf16>, vector<256x256xbf16>, vector<16x256xf32> -> vector<16x256xf32>
    %c0_9 = arith.constant 0 : index
    %c0_10 = arith.constant 0 : index
    %12 = vector.load %arg5[%c0_9, %c0_10] : memref<1x256xf32, #tpu.memory_space<vmem>>, vector<1x256xf32>
    %13 = vector.broadcast %12 : vector<1x256xf32> to vector<16x256xf32>
    %14 = arith.addf %11, %13 : vector<16x256xf32>
    %cst_11 = arith.constant 0.000000e+00 : f32
    %15 = vector.broadcast %cst_11 : f32 to vector<16x256xf32>
    %16 = arith.maximumf %14, %15 : vector<16x256xf32>
    %17 = arith.truncf %16 : vector<16x256xf32> to vector<16x256xbf16>
    %c0_12 = arith.constant 0 : index
    %c0_13 = arith.constant 0 : index
    %18 = vector.load %arg6[%c0_12, %c0_13] : memref<256x256xbf16, #tpu.memory_space<vmem>>, vector<256x256xbf16>
    %cst_14 = arith.constant dense<0.000000e+00> : vector<16x256xf32>
    %19 = tpu.matmul %17, %18, %cst_14 {dimension_numbers = #tpu.dot_dimension_numbers<[1], [0], [0], [1], [0, 0, 1, 1], [], []>} : vector<16x256xbf16>, vector<256x256xbf16>, vector<16x256xf32> -> vector<16x256xf32>
    %c0_15 = arith.constant 0 : index
    %c0_16 = arith.constant 0 : index
    %20 = vector.load %arg7[%c0_15, %c0_16] : memref<1x256xf32, #tpu.memory_space<vmem>>, vector<1x256xf32>
    %21 = vector.broadcast %20 : vector<1x256xf32> to vector<16x256xf32>
    %22 = arith.addf %19, %21 : vector<16x256xf32>
    %cst_17 = arith.constant 0.000000e+00 : f32
    %23 = vector.broadcast %cst_17 : f32 to vector<16x256xf32>
    %24 = arith.maximumf %22, %23 : vector<16x256xf32>
    %25 = arith.truncf %24 : vector<16x256xf32> to vector<16x256xbf16>
    %c0_18 = arith.constant 0 : index
    %c0_19 = arith.constant 0 : index
    %26 = vector.load %arg8[%c0_18, %c0_19] : memref<256x256xbf16, #tpu.memory_space<vmem>>, vector<256x256xbf16>
    %cst_20 = arith.constant dense<0.000000e+00> : vector<16x256xf32>
    %27 = tpu.matmul %25, %26, %cst_20 {dimension_numbers = #tpu.dot_dimension_numbers<[1], [0], [0], [1], [0, 0, 1, 1], [], []>} : vector<16x256xbf16>, vector<256x256xbf16>, vector<16x256xf32> -> vector<16x256xf32>
    %c0_21 = arith.constant 0 : index
    %c0_22 = arith.constant 0 : index
    %28 = vector.load %arg9[%c0_21, %c0_22] : memref<1x256xf32, #tpu.memory_space<vmem>>, vector<1x256xf32>
    %29 = vector.broadcast %28 : vector<1x256xf32> to vector<16x256xf32>
    %30 = arith.addf %27, %29 : vector<16x256xf32>
    %cst_23 = arith.constant 0.000000e+00 : f32
    %31 = vector.broadcast %cst_23 : f32 to vector<16x256xf32>
    %32 = arith.maximumf %30, %31 : vector<16x256xf32>
    %33 = arith.truncf %32 : vector<16x256xf32> to vector<16x256xbf16>
    %c0_24 = arith.constant 0 : index
    %c0_25 = arith.constant 0 : index
    %34 = vector.load %arg10[%c0_24, %c0_25] : memref<256x256xbf16, #tpu.memory_space<vmem>>, vector<256x256xbf16>
    %cst_26 = arith.constant dense<0.000000e+00> : vector<16x256xf32>
    %35 = tpu.matmul %33, %34, %cst_26 {dimension_numbers = #tpu.dot_dimension_numbers<[1], [0], [0], [1], [0, 0, 1, 1], [], []>} : vector<16x256xbf16>, vector<256x256xbf16>, vector<16x256xf32> -> vector<16x256xf32>
    %c0_27 = arith.constant 0 : index
    %c0_28 = arith.constant 0 : index
    %36 = vector.load %arg11[%c0_27, %c0_28] : memref<1x256xf32, #tpu.memory_space<vmem>>, vector<1x256xf32>
    %37 = vector.broadcast %36 : vector<1x256xf32> to vector<16x256xf32>
    %38 = arith.addf %35, %37 : vector<16x256xf32>
    %cst_29 = arith.constant 0.000000e+00 : f32
    %39 = vector.broadcast %cst_29 : f32 to vector<16x256xf32>
    %40 = arith.maximumf %38, %39 : vector<16x256xf32>
    %41 = arith.truncf %40 : vector<16x256xf32> to vector<16x256xbf16>
    %c0_30 = arith.constant 0 : index
    %c0_31 = arith.constant 0 : index
    %42 = vector.load %arg12[%c0_30, %c0_31] : memref<256x8xbf16, #tpu.memory_space<vmem>>, vector<256x8xbf16>
    %cst_32 = arith.constant dense<0.000000e+00> : vector<16x8xf32>
    %43 = tpu.matmul %41, %42, %cst_32 {dimension_numbers = #tpu.dot_dimension_numbers<[1], [0], [0], [1], [0, 0, 1, 1], [], []>} : vector<16x256xbf16>, vector<256x8xbf16>, vector<16x8xf32> -> vector<16x8xf32>
    %c0_33 = arith.constant 0 : index
    %c0_34 = arith.constant 0 : index
    %44 = vector.load %arg13[%c0_33, %c0_34] : memref<1x8xf32, #tpu.memory_space<vmem>>, vector<1x8xf32>
    %45 = vector.broadcast %44 : vector<1x8xf32> to vector<16x8xf32>
    %46 = arith.addf %43, %45 : vector<16x8xf32>
    %c0_35 = arith.constant 0 : index
    %c0_36 = arith.constant 0 : index
    %47 = vector.load %arg14[%c0_35, %c0_36] : memref<16x8xf32, #tpu.memory_space<vmem>>, vector<16x8xf32>
    tpu.vector_store %arg14[%c0_35, %c0_36], %46 {strides = array<i32>} : memref<16x8xf32, #tpu.memory_space<vmem>>, vector<16x8xf32>,
    return
  }
  func.func @transform_0(%arg0: i32) -> (i32, i32) {
    %c0_i32 = arith.constant 0 : i32
    %c0_i32_0 = arith.constant 0 : i32
    return %arg0, %c0_i32 : i32, i32
  }
  func.func @transform_1(%arg0: i32) -> (i32, i32) {
    %c0_i32 = arith.constant 0 : i32
    %c0_i32_0 = arith.constant 0 : i32
    %c0_i32_1 = arith.constant 0 : i32
    return %c0_i32, %c0_i32_0 : i32, i32
  }
  func.func @transform_2(%arg0: i32) -> (i32, i32) {
    %c0_i32 = arith.constant 0 : i32
    %c0_i32_0 = arith.constant 0 : i32
    %c0_i32_1 = arith.constant 0 : i32
    return %c0_i32, %c0_i32_0 : i32, i32
  }
  func.func @transform_3(%arg0: i32) -> (i32, i32) {
    %c0_i32 = arith.constant 0 : i32
    %c0_i32_0 = arith.constant 0 : i32
    %c0_i32_1 = arith.constant 0 : i32
    return %c0_i32, %c0_i32_0 : i32, i32
  }
  func.func @transform_4(%arg0: i32) -> (i32, i32) {
    %c0_i32 = arith.constant 0 : i32
    %c0_i32_0 = arith.constant 0 : i32
    %c0_i32_1 = arith.constant 0 : i32
    return %c0_i32, %c0_i32_0 : i32, i32
  }
  func.func @transform_5(%arg0: i32) -> (i32, i32) {
    %c0_i32 = arith.constant 0 : i32
    %c0_i32_0 = arith.constant 0 : i32
    %c0_i32_1 = arith.constant 0 : i32
    return %c0_i32, %c0_i32_0 : i32, i32
  }
  func.func @transform_6(%arg0: i32) -> (i32, i32) {
    %c0_i32 = arith.constant 0 : i32
    %c0_i32_0 = arith.constant 0 : i32
    %c0_i32_1 = arith.constant 0 : i32
    return %c0_i32, %c0_i32_0 : i32, i32
  }
  func.func @transform_7(%arg0: i32) -> (i32, i32) {
    %c0_i32 = arith.constant 0 : i32
    %c0_i32_0 = arith.constant 0 : i32
    %c0_i32_1 = arith.constant 0 : i32
    return %c0_i32, %c0_i32_0 : i32, i32
  }
  func.func @transform_8(%arg0: i32) -> (i32, i32) {
    %c0_i32 = arith.constant 0 : i32
    %c0_i32_0 = arith.constant 0 : i32
    %c0_i32_1 = arith.constant 0 : i32
    return %c0_i32, %c0_i32_0 : i32, i32
  }
  func.func @transform_9(%arg0: i32) -> (i32, i32) {
    %c0_i32 = arith.constant 0 : i32
    %c0_i32_0 = arith.constant 0 : i32
    %c0_i32_1 = arith.constant 0 : i32
    return %c0_i32, %c0_i32_0 : i32, i32
  }
  func.func @transform_10(%arg0: i32) -> (i32, i32) {
    %c0_i32 = arith.constant 0 : i32
    %c0_i32_0 = arith.constant 0 : i32
    %c0_i32_1 = arith.constant 0 : i32
    return %c0_i32, %c0_i32_0 : i32, i32
  }
  func.func @transform_11(%arg0: i32) -> (i32, i32) {
    %c0_i32 = arith.constant 0 : i32
    %c0_i32_0 = arith.constant 0 : i32
    %c0_i32_1 = arith.constant 0 : i32
    return %c0_i32, %c0_i32_0 : i32, i32
  }
  func.func @transform_12(%arg0: i32) -> (i32, i32) {
    %c0_i32 = arith.constant 0 : i32
    %c0_i32_0 = arith.constant 0 : i32
    %c0_i32_1 = arith.constant 0 : i32
    return %c0_i32, %c0_i32_0 : i32, i32
  }
  func.func @transform_13(%arg0: i32) -> (i32, i32) {
    %c0_i32 = arith.constant 0 : i32
    %c0_i32_0 = arith.constant 0 : i32
    return %arg0, %c0_i32 : i32, i32
  }
}

</mosaic_0001>

<llo_original>
// kernel: simple_nn_forward.1
$region0: #{simple_nn_forward.1}
  #allocation0 [shape = 'u32[]', space=smem, size = 0x4, offset = 0x4, fixed_abs, tag = 'smem constant byte address 0x4 - core index']
  #allocation1 [shape = 'u32[144,128]{1,0:T(1,128)}', space=vmem, size = 0x12000, scoped, tag = 'internal scratch']
  %s0 = inlined_call_operand.vmem [shape: f32[16,32], index: 0, kind: input, shape index: {}]
  %s1 = inlined_call_operand.vmem [shape: bf16[32,256], index: 1, kind: input, shape index: {}]
  %s2 = inlined_call_operand.vmem [shape: f32[1,256], index: 2, kind: input, shape index: {}]
  %s3 = inlined_call_operand.hbm [shape: bf16[256,256], index: 3, kind: input, shape index: {}]
  %s4 = inlined_call_operand.vmem [shape: f32[1,256], index: 4, kind: input, shape index: {}]
  %s5 = inlined_call_operand.hbm [shape: bf16[256,256], index: 5, kind: input, shape index: {}]
  %s6 = inlined_call_operand.vmem [shape: f32[1,256], index: 6, kind: input, shape index: {}]
  %s7 = inlined_call_operand.hbm [shape: bf16[256,256], index: 7, kind: input, shape index: {}]
  %s8 = inlined_call_operand.vmem [shape: f32[1,256], index: 8, kind: input, shape index: {}]
  %s9 = inlined_call_operand.hbm [shape: bf16[256,256], index: 9, kind: input, shape index: {}]
  %s10 = inlined_call_operand.vmem [shape: f32[1,256], index: 10, kind: input, shape index: {}]
  %s11 = inlined_call_operand.vmem [shape: bf16[256,8], index: 11, kind: input, shape index: {}]
  %s12 = inlined_call_operand.vmem [shape: f32[1,8], index: 12, kind: input, shape index: {}]
  %s13 = inlined_call_operand.vmem [shape: f32[16,8], index: 13, kind: output, shape index: {}]
  %s14 = sld [smem:[#allocation0]]
  $region78: #{simple_nn_forward.1} parent=0
    _
  %s16 = ssub.s32 1, %s14
  %s17 = scalar_select 0, %s16, %s14
  $region1: #{simple_nn_forward.1} parent=0
    #allocation2 [shape = 'u8[131072]{0}', space=vmem, size = 0x20000, scoped, tag = 'input window, operand 3, single buffered']
    #allocation3 [shape = 's32[1]{0}', space=sflag, size = 0x4, scoped, tag = 'scoped memory for simple_nn_forward.1']
    #allocation4 [shape = 'u8[131072]{0}', space=vmem, size = 0x20000, scoped, tag = 'input window, operand 5, single buffered']
    #allocation5 [shape = 's32[1]{0}', space=sflag, size = 0x4, scoped, tag = 'scoped memory for simple_nn_forward.1']
    #allocation6 [shape = 'u8[131072]{0}', space=vmem, size = 0x20000, scoped, tag = 'input window, operand 7, single buffered']
    #allocation7 [shape = 'u8[131072]{0}', space=vmem, size = 0x20000, scoped, tag = 'input window, operand 9, single buffered']
    #allocation8 [shape = 's32[1]{0}', space=sflag, size = 0x4, scoped, tag = 'scoped memory for simple_nn_forward.1']
    %18 = vsyncpa [#allocation3], 0
    %19 = vsyncpa [#allocation5], 0
    %20 = vsyncpa [#allocation8], 0
    // Predicated region
    $region2: #{simple_nn_forward.1} parent=1 // pred_check
      _
    $region3: #{simple_nn_forward.1} parent=1 // pred_check_branch
      %22 = sbr.rel (0) target = $region5
    $region4: #{simple_nn_forward.1} parent=1 // pred_region
      _
    $region5: #{simple_nn_forward.1} parent=1 // pred_fallthru
      _
    // Predicated region
    $region6: #{simple_nn_forward.1} parent=1 // pred_check
      _
    $region7: #{simple_nn_forward.1} parent=1 // pred_check_branch
      %24 = sbr.rel (0) target = $region9
    $region8: #{simple_nn_forward.1} parent=1 // pred_region
      _
    $region9: #{simple_nn_forward.1} parent=1 // pred_fallthru
      _
    // Predicated region
    $region10: #{simple_nn_forward.1} parent=1 // pred_check
      _
    $region11: #{simple_nn_forward.1} parent=1 // pred_check_branch
      %26 = sbr.rel (0) target = $region13
    $region12: #{simple_nn_forward.1} parent=1 // pred_region
      _
    $region13: #{simple_nn_forward.1} parent=1 // pred_fallthru
      _
    // Predicated region
    $region14: #{simple_nn_forward.1} parent=1 // pred_check
      _
    $region15: #{simple_nn_forward.1} parent=1 // pred_check_branch
      %28 = sbr.rel (0) target = $region17
    $region16: #{simple_nn_forward.1} parent=1 // pred_region
      %s30 = ssub.s32 4096, 4096
      %31 = vsyncadd [#allocation3], %s30
      %s32 = sshll.u32 [#allocation2], 4
      %s33 = int_to_ptr.vmem [resolvable:$true] %s32
      %38 = dma.hbm_to_vmem [thread:$0]  %s3, 4096, %s33, [#allocation3], 128, 128, 8
    $region17: #{simple_nn_forward.1} parent=1 // pred_fallthru
      _
    // Predicated region
    $region18: #{simple_nn_forward.1} parent=1 // pred_check
      _
    $region19: #{simple_nn_forward.1} parent=1 // pred_check_branch
      %40 = sbr.rel (0) target = $region21
    $region20: #{simple_nn_forward.1} parent=1 // pred_region
      _
    $region21: #{simple_nn_forward.1} parent=1 // pred_fallthru
      _
    // Predicated region
    $region22: #{simple_nn_forward.1} parent=1 // pred_check
      _
    $region23: #{simple_nn_forward.1} parent=1 // pred_check_branch
      %42 = sbr.rel (0) target = $region25
    $region24: #{simple_nn_forward.1} parent=1 // pred_region
      %s44 = ssub.s32 4096, 4096
      %45 = vsyncadd [#allocation5], %s44
      %s46 = sshll.u32 [#allocation4], 4
      %s47 = int_to_ptr.vmem [resolvable:$true] %s46
      %52 = dma.hbm_to_vmem [thread:$0]  %s5, 4096, %s47, [#allocation5], 128, 128, 8
    $region25: #{simple_nn_forward.1} parent=1 // pred_fallthru
      _
    // Predicated region
    $region26: #{simple_nn_forward.1} parent=1 // pred_check
      _
    $region27: #{simple_nn_forward.1} parent=1 // pred_check_branch
      %54 = sbr.rel (0) target = $region29
    $region28: #{simple_nn_forward.1} parent=1 // pred_region
      _
    $region29: #{simple_nn_forward.1} parent=1 // pred_fallthru
      _
    // Predicated region
    $region30: #{simple_nn_forward.1} parent=1 // pred_check
      _
    $region31: #{simple_nn_forward.1} parent=1 // pred_check_branch
      %56 = sbr.rel (0) target = $region33
    $region32: #{simple_nn_forward.1} parent=1 // pred_region
      %s58 = ssub.s32 4096, 4096
      %59 = vsyncadd [#allocation5], %s58
      %s60 = sshll.u32 [#allocation6], 4
      %s61 = int_to_ptr.vmem [resolvable:$true] %s60
      %66 = dma.hbm_to_vmem [thread:$0]  %s7, 4096, %s61, [#allocation5], 128, 128, 8
    $region33: #{simple_nn_forward.1} parent=1 // pred_fallthru
      _
    // Predicated region
    $region34: #{simple_nn_forward.1} parent=1 // pred_check
      _
    $region35: #{simple_nn_forward.1} parent=1 // pred_check_branch
      %68 = sbr.rel (0) target = $region37
    $region36: #{simple_nn_forward.1} parent=1 // pred_region
      _
    $region37: #{simple_nn_forward.1} parent=1 // pred_fallthru
      _
    // Predicated region
    $region38: #{simple_nn_forward.1} parent=1 // pred_check
      _
    $region39: #{simple_nn_forward.1} parent=1 // pred_check_branch
      %70 = sbr.rel (0) target = $region41
    $region40: #{simple_nn_forward.1} parent=1 // pred_region
      %s72 = ssub.s32 4096, 4096
      %73 = vsyncadd [#allocation8], %s72
      %s74 = sshll.u32 [#allocation7], 4
      %s75 = int_to_ptr.vmem [resolvable:$true] %s74
      %80 = dma.hbm_to_vmem [thread:$0]  %s9, 4096, %s75, [#allocation8], 128, 128, 8
    $region41: #{simple_nn_forward.1} parent=1 // pred_fallthru
      _
    // Predicated region
    $region42: #{simple_nn_forward.1} parent=1 // pred_check
      _
    $region43: #{simple_nn_forward.1} parent=1 // pred_check_branch
      %82 = sbr.rel (0) target = $region45
    $region44: #{simple_nn_forward.1} parent=1 // pred_region
      _
    $region45: #{simple_nn_forward.1} parent=1 // pred_fallthru
      _
    // Predicated region
    $region46: #{simple_nn_forward.1} parent=1 // pred_check
      _
    $region47: #{simple_nn_forward.1} parent=1 // pred_check_branch
      %84 = sbr.rel (0) target = $region49
    $region48: #{simple_nn_forward.1} parent=1 // pred_region
      _
    $region49: #{simple_nn_forward.1} parent=1 // pred_fallthru
      _
    // Predicated region
    $region50: #{simple_nn_forward.1} parent=1 // pred_check
      _
    $region51: #{simple_nn_forward.1} parent=1 // pred_check_branch
      %86 = sbr.rel (0) target = $region53
    $region52: #{simple_nn_forward.1} parent=1 // pred_region
      _
    $region53: #{simple_nn_forward.1} parent=1 // pred_fallthru
      _
    // Predicated region
    $region54: #{simple_nn_forward.1} parent=1 // pred_check
      _
    $region55: #{simple_nn_forward.1} parent=1 // pred_check_branch
      %88 = sbr.rel (0) target = $region57
    $region56: #{simple_nn_forward.1} parent=1 // pred_region
      %89 = dma.done [#allocation3], 4096
    $region57: #{simple_nn_forward.1} parent=1 // pred_fallthru
      _
    // Predicated region
    $region58: #{simple_nn_forward.1} parent=1 // pred_check
      _
    $region59: #{simple_nn_forward.1} parent=1 // pred_check_branch
      %91 = sbr.rel (0) target = $region61
    $region60: #{simple_nn_forward.1} parent=1 // pred_region
      %92 = dma.done [#allocation5], 4096
    $region61: #{simple_nn_forward.1} parent=1 // pred_fallthru
      _
    // Predicated region
    $region62: #{simple_nn_forward.1} parent=1 // pred_check
      _
    $region63: #{simple_nn_forward.1} parent=1 // pred_check_branch
      %94 = sbr.rel (0) target = $region65
    $region64: #{simple_nn_forward.1} parent=1 // pred_region
      %95 = dma.done [#allocation5], 4096
    $region65: #{simple_nn_forward.1} parent=1 // pred_fallthru
      _
    // Predicated region
    $region66: #{simple_nn_forward.1} parent=1 // pred_check
      _
    $region67: #{simple_nn_forward.1} parent=1 // pred_check_branch
      %97 = sbr.rel (0) target = $region69
    $region68: #{simple_nn_forward.1} parent=1 // pred_region
      %98 = dma.done [#allocation8], 4096
    $region69: #{simple_nn_forward.1} parent=1 // pred_fallthru
      _
    %v100 = vld [vmem:[%s0] sm:$0xff]
    %v101 = vld [vmem:[%s0 + $0x8] sm:$0xff]
    %v102 = vpack.c.bf16 %v101, %v100
    %v103 = vld [vmem:[%s1] sm:$0xff]
    %v104 = vld [vmem:[%s1 + $0x8] sm:$0xff]
    %v105 = vld [vmem:[%s1 + $0x10] sm:$0xff]
    %v106 = vld [vmem:[%s1 + $0x18] sm:$0xff]
    %v107 = vld [vmem:[%s2] sm:$0x3]
    %v109 = vlaneseq
    %v110 = vshrl.u32 %v109, 7
    %v111 = vsub.s32 0, %v110
    %v112 = vrot.slane %v107, %v111
    %v113 = vlaneseq
    %v114 = vshrl.u32 %v113, 7
    %v115 = vsub.s32 1, %v114
    %v116 = vrot.slane %v107, %v115
    %v123 = vunpack.c.l.b16 %v103
    %v124 = vunpack.c.h.b16 %v103
    %v125 = vunpack.c.l.b16 %v104
    %v126 = vunpack.c.h.b16 %v104
    %v127 = vunpack.c.l.b16 %v105
    %v128 = vunpack.c.h.b16 %v105
    %v129 = vunpack.c.l.b16 %v106
    %v130 = vunpack.c.h.b16 %v106
    %v131 = vpack.c.b16 %v125, %v123
    %v132 = vpack.c.b16 %v126, %v124
    %v133 = vpack.c.b16 %v129, %v127
    %v134 = vpack.c.b16 %v130, %v128
    %vm139 = vcmask 261120
    %v141 = vsel %vm139, %v102, 0
    %143 = vmatprep.subr.bf16.mxu0 %v132
    %144 = vmatpush1.bf16.msra.mxu0 %v131
    %145 = vmatprep.subr.bf16.mxu0 %v134
    %146 = vmatpush1.bf16.msra.mxu0 %v133
    %147 = vmatprep.subr.bf16.mxu0 0
    %148 = vmatpush1.bf16.msra.mxu0 0
    %149 = vmatprep.subr.bf16.mxu0 0
    %150 = vmatpush1.bf16.msra.mxu0 0
    %151 = vmatprep.subr.bf16.mxu0 0
    %152 = vmatpush1.bf16.msra.mxu0 0
    %153 = vmatprep.subr.bf16.mxu0 0
    %154 = vmatpush1.bf16.msra.mxu0 0
    %155 = vmatprep.subr.bf16.mxu0 0
    %156 = vmatpush1.bf16.msra.mxu0 0
    %157 = vmatprep.subr.bf16.mxu0 0
    %158 = vmatpush1.bf16.msra.mxu0 0
    %159 = vmatprep.subr.bf16.mxu0 0
    %160 = vmatpush1.bf16.msra.mxu0 0
    %161 = vmatprep.subr.bf16.mxu0 0
    %162 = vmatpush1.bf16.msra.mxu0 0
    %163 = vmatprep.subr.bf16.mxu0 0
    %164 = vmatpush1.bf16.msra.mxu0 0
    %165 = vmatprep.subr.bf16.mxu0 0
    %166 = vmatpush1.bf16.msra.mxu0 0
    %167 = vmatprep.subr.bf16.mxu0 0
    %168 = vmatpush1.bf16.msra.mxu0 0
    %169 = vmatprep.subr.bf16.mxu0 0
    %170 = vmatpush1.bf16.msra.mxu0 0
    %171 = vmatprep.subr.bf16.mxu0 0
    %172 = vmatpush1.bf16.msra.mxu0 0
    %173 = vmatprep.subr.bf16.mxu0 0
    %174 = vmatpush1.bf16.msra.mxu0 0
    %175 = vmatprep.mubr.bf16.mxu0 0
    %176 = vmatmul.mubr.bf16.gmra.mrb[0].mxu0 %v141
    %v177 = vpop.f32.mrb[0].mxu0
    %v178 = vadd.f32 %v112, %v177
    %v179 = vpop.f32.mrb[0].mxu0
    %v180 = vadd.f32 %v116, %v179
    %v181 = vpop.f32.mrb[0].mxu0
    %v182 = vadd.f32 %v112, %v181
    %v183 = vpop.f32.mrb[0].mxu0
    %v184 = vadd.f32 %v116, %v183
    %185 = vdwg.mxu0
    %v186 = vmax.f32 %v178, 0.0
    %v187 = vmax.f32 %v180, 0.0
    %v188 = vmax.f32 %v182, 0.0
    %v189 = vmax.f32 %v184, 0.0
    %v190 = vpack.c.bf16 %v188, %v186
    %v191 = vpack.c.bf16 %v189, %v187
    %v192 = vld [vmem:[#allocation2] sm:$0xff]
    %v193 = vld [vmem:[#allocation2 + $0x8] sm:$0xff]
    %v194 = vld [vmem:[#allocation2 + $0x10] sm:$0xff]
    %v195 = vld [vmem:[#allocation2 + $0x18] sm:$0xff]
    %v196 = vld [vmem:[#allocation2 + $0x20] sm:$0xff]
    %v197 = vld [vmem:[#allocation2 + $0x28] sm:$0xff]
    %v198 = vld [vmem:[#allocation2 + $0x30] sm:$0xff]
    %v199 = vld [vmem:[#allocation2 + $0x38] sm:$0xff]
    %v200 = vld [vmem:[#allocation2 + $0x40] sm:$0xff]
    %v201 = vld [vmem:[#allocation2 + $0x48] sm:$0xff]
    %v202 = vld [vmem:[#allocation2 + $0x50] sm:$0xff]
    %v203 = vld [vmem:[#allocation2 + $0x58] sm:$0xff]
    %v204 = vld [vmem:[#allocation2 + $0x60] sm:$0xff]
    %v205 = vld [vmem:[#allocation2 + $0x68] sm:$0xff]
    %v206 = vld [vmem:[#allocation2 + $0x70] sm:$0xff]
    %v207 = vld [vmem:[#allocation2 + $0x78] sm:$0xff]
    %v208 = vld [vmem:[#allocation2 + $0x80] sm:$0xff]
    %v209 = vld [vmem:[#allocation2 + $0x88] sm:$0xff]
    %v210 = vld [vmem:[#allocation2 + $0x90] sm:$0xff]
    %v211 = vld [vmem:[#allocation2 + $0x98] sm:$0xff]
    %v212 = vld [vmem:[#allocation2 + $0xa0] sm:$0xff]
    %v213 = vld [vmem:[#allocation2 + $0xa8] sm:$0xff]
    %v214 = vld [vmem:[#allocation2 + $0xb0] sm:$0xff]
    %v215 = vld [vmem:[#allocation2 + $0xb8] sm:$0xff]
    %v216 = vld [vmem:[#allocation2 + $0xc0] sm:$0xff]
    %v217 = vld [vmem:[#allocation2 + $0xc8] sm:$0xff]
    %v218 = vld [vmem:[#allocation2 + $0xd0] sm:$0xff]
    %v219 = vld [vmem:[#allocation2 + $0xd8] sm:$0xff]
    %v220 = vld [vmem:[#allocation2 + $0xe0] sm:$0xff]
    %v221 = vld [vmem:[#allocation2 + $0xe8] sm:$0xff]
    %v222 = vld [vmem:[#allocation2 + $0xf0] sm:$0xff]
    %v223 = vld [vmem:[#allocation2 + $0xf8] sm:$0xff]
    %v224 = vld [vmem:[%s4] sm:$0x3]
    %v226 = vlaneseq
    %v227 = vshrl.u32 %v226, 7
    %v228 = vsub.s32 0, %v227
    %v229 = vrot.slane %v224, %v228
    %v230 = vlaneseq
    %v231 = vshrl.u32 %v230, 7
    %v232 = vsub.s32 1, %v231
    %v233 = vrot.slane %v224, %v232
    %v268 = vunpack.c.l.b16 %v192
    %v269 = vunpack.c.h.b16 %v192
    %v270 = vunpack.c.l.b16 %v193
    %v271 = vunpack.c.h.b16 %v193
    %v272 = vunpack.c.l.b16 %v194
    %v273 = vunpack.c.h.b16 %v194
    %v274 = vunpack.c.l.b16 %v195
    %v275 = vunpack.c.h.b16 %v195
    %v276 = vunpack.c.l.b16 %v196
    %v277 = vunpack.c.h.b16 %v196
    %v278 = vunpack.c.l.b16 %v197
    %v279 = vunpack.c.h.b16 %v197
    %v280 = vunpack.c.l.b16 %v198
    %v281 = vunpack.c.h.b16 %v198
    %v282 = vunpack.c.l.b16 %v199
    %v283 = vunpack.c.h.b16 %v199
    %v284 = vunpack.c.l.b16 %v200
    %v285 = vunpack.c.h.b16 %v200
    %v286 = vunpack.c.l.b16 %v201
    %v287 = vunpack.c.h.b16 %v201
    %v288 = vunpack.c.l.b16 %v202
    %v289 = vunpack.c.h.b16 %v202
    %v290 = vunpack.c.l.b16 %v203
    %v291 = vunpack.c.h.b16 %v203
    %v292 = vunpack.c.l.b16 %v204
    %v293 = vunpack.c.h.b16 %v204
    %v294 = vunpack.c.l.b16 %v205
    %v295 = vunpack.c.h.b16 %v205
    %v296 = vunpack.c.l.b16 %v206
    %v297 = vunpack.c.h.b16 %v206
    %v298 = vunpack.c.l.b16 %v207
    %v299 = vunpack.c.h.b16 %v207
    %v300 = vunpack.c.l.b16 %v208
    %v301 = vunpack.c.h.b16 %v208
    %v302 = vunpack.c.l.b16 %v209
    %v303 = vunpack.c.h.b16 %v209
    %v304 = vunpack.c.l.b16 %v210
    %v305 = vunpack.c.h.b16 %v210
    %v306 = vunpack.c.l.b16 %v211
    %v307 = vunpack.c.h.b16 %v211
    %v308 = vunpack.c.l.b16 %v212
    %v309 = vunpack.c.h.b16 %v212
    %v310 = vunpack.c.l.b16 %v213
    %v311 = vunpack.c.h.b16 %v213
    %v312 = vunpack.c.l.b16 %v214
    %v313 = vunpack.c.h.b16 %v214
    %v314 = vunpack.c.l.b16 %v215
    %v315 = vunpack.c.h.b16 %v215
    %v316 = vunpack.c.l.b16 %v216
    %v317 = vunpack.c.h.b16 %v216
    %v318 = vunpack.c.l.b16 %v217
    %v319 = vunpack.c.h.b16 %v217
    %v320 = vunpack.c.l.b16 %v218
    %v321 = vunpack.c.h.b16 %v218
    %v322 = vunpack.c.l.b16 %v219
    %v323 = vunpack.c.h.b16 %v219
    %v324 = vunpack.c.l.b16 %v220
    %v325 = vunpack.c.h.b16 %v220
    %v326 = vunpack.c.l.b16 %v221
    %v327 = vunpack.c.h.b16 %v221
    %v328 = vunpack.c.l.b16 %v222
    %v329 = vunpack.c.h.b16 %v222
    %v330 = vunpack.c.l.b16 %v223
    %v331 = vunpack.c.h.b16 %v223
    %v332 = vpack.c.b16 %v270, %v268
    %v333 = vpack.c.b16 %v271, %v269
    %v334 = vpack.c.b16 %v274, %v272
    %v335 = vpack.c.b16 %v275, %v273
    %v336 = vpack.c.b16 %v278, %v276
    %v337 = vpack.c.b16 %v279, %v277
    %v338 = vpack.c.b16 %v282, %v280
    %v339 = vpack.c.b16 %v283, %v281
    %v340 = vpack.c.b16 %v286, %v284
    %v341 = vpack.c.b16 %v287, %v285
    %v342 = vpack.c.b16 %v290, %v288
    %v343 = vpack.c.b16 %v291, %v289
    %v344 = vpack.c.b16 %v294, %v292
    %v345 = vpack.c.b16 %v295, %v293
    %v346 = vpack.c.b16 %v298, %v296
    %v347 = vpack.c.b16 %v299, %v297
    %v348 = vpack.c.b16 %v302, %v300
    %v349 = vpack.c.b16 %v303, %v301
    %v350 = vpack.c.b16 %v306, %v304
    %v351 = vpack.c.b16 %v307, %v305
    %v352 = vpack.c.b16 %v310, %v308
    %v353 = vpack.c.b16 %v311, %v309
    %v354 = vpack.c.b16 %v314, %v312
    %v355 = vpack.c.b16 %v315, %v313
    %v356 = vpack.c.b16 %v318, %v316
    %v357 = vpack.c.b16 %v319, %v317
    %v358 = vpack.c.b16 %v322, %v320
    %v359 = vpack.c.b16 %v323, %v321
    %v360 = vpack.c.b16 %v326, %v324
    %v361 = vpack.c.b16 %v327, %v325
    %v362 = vpack.c.b16 %v330, %v328
    %v363 = vpack.c.b16 %v331, %v329
    %396 = vmatprep.subr.bf16.mxu0 %v333
    %397 = vmatpush1.bf16.msra.mxu0 %v332
    %398 = vmatprep.subr.bf16.mxu0 %v335
    %399 = vmatpush1.bf16.msra.mxu0 %v334
    %400 = vmatprep.subr.bf16.mxu0 %v337
    %401 = vmatpush1.bf16.msra.mxu0 %v336
    %402 = vmatprep.subr.bf16.mxu0 %v339
    %403 = vmatpush1.bf16.msra.mxu0 %v338
    %404 = vmatprep.subr.bf16.mxu0 %v341
    %405 = vmatpush1.bf16.msra.mxu0 %v340
    %406 = vmatprep.subr.bf16.mxu0 %v343
    %407 = vmatpush1.bf16.msra.mxu0 %v342
    %408 = vmatprep.subr.bf16.mxu0 %v345
    %409 = vmatpush1.bf16.msra.mxu0 %v344
    %410 = vmatprep.subr.bf16.mxu0 %v347
    %411 = vmatpush1.bf16.msra.mxu0 %v346
    %412 = vmatprep.subr.bf16.mxu0 %v349
    %413 = vmatpush1.bf16.msra.mxu0 %v348
    %414 = vmatprep.subr.bf16.mxu0 %v351
    %415 = vmatpush1.bf16.msra.mxu0 %v350
    %416 = vmatprep.subr.bf16.mxu0 %v353
    %417 = vmatpush1.bf16.msra.mxu0 %v352
    %418 = vmatprep.subr.bf16.mxu0 %v355
    %419 = vmatpush1.bf16.msra.mxu0 %v354
    %420 = vmatprep.subr.bf16.mxu0 %v357
    %421 = vmatpush1.bf16.msra.mxu0 %v356
    %422 = vmatprep.subr.bf16.mxu0 %v359
    %423 = vmatpush1.bf16.msra.mxu0 %v358
    %424 = vmatprep.subr.bf16.mxu0 %v361
    %425 = vmatpush1.bf16.msra.mxu0 %v360
    %426 = vmatprep.subr.bf16.mxu0 %v363
    %427 = vmatpush1.bf16.msra.mxu0 %v362
    %428 = vmatprep.mubr.bf16.mxu0 %v191
    %429 = vmatmul.mubr.bf16.gmra.mrb[0].mxu0 %v190
    %v430 = vpop.f32.mrb[0].mxu0
    %v431 = vadd.f32 %v229, %v430
    %v432 = vpop.f32.mrb[0].mxu0
    %v433 = vadd.f32 %v233, %v432
    %v434 = vpop.f32.mrb[0].mxu0
    %v435 = vadd.f32 %v229, %v434
    %v436 = vpop.f32.mrb[0].mxu0
    %v437 = vadd.f32 %v233, %v436
    %438 = vdwg.mxu0
    %v439 = vmax.f32 %v431, 0.0
    %v440 = vmax.f32 %v433, 0.0
    %v441 = vmax.f32 %v435, 0.0
    %v442 = vmax.f32 %v437, 0.0
    %v443 = vpack.c.bf16 %v441, %v439
    %v444 = vpack.c.bf16 %v442, %v440
    %v445 = vld [vmem:[#allocation4] sm:$0xff]
    %v446 = vld [vmem:[#allocation4 + $0x8] sm:$0xff]
    %v447 = vld [vmem:[#allocation4 + $0x10] sm:$0xff]
    %v448 = vld [vmem:[#allocation4 + $0x18] sm:$0xff]
    %v449 = vld [vmem:[#allocation4 + $0x20] sm:$0xff]
    %v450 = vld [vmem:[#allocation4 + $0x28] sm:$0xff]
    %v451 = vld [vmem:[#allocation4 + $0x30] sm:$0xff]
    %v452 = vld [vmem:[#allocation4 + $0x38] sm:$0xff]
    %v453 = vld [vmem:[#allocation4 + $0x40] sm:$0xff]
    %v454 = vld [vmem:[#allocation4 + $0x48] sm:$0xff]
    %v455 = vld [vmem:[#allocation4 + $0x50] sm:$0xff]
    %v456 = vld [vmem:[#allocation4 + $0x58] sm:$0xff]
    %v457 = vld [vmem:[#allocation4 + $0x60] sm:$0xff]
    %v458 = vld [vmem:[#allocation4 + $0x68] sm:$0xff]
    %v459 = vld [vmem:[#allocation4 + $0x70] sm:$0xff]
    %v460 = vld [vmem:[#allocation4 + $0x78] sm:$0xff]
    %v461 = vld [vmem:[#allocation4 + $0x80] sm:$0xff]
    %v462 = vld [vmem:[#allocation4 + $0x88] sm:$0xff]
    %v463 = vld [vmem:[#allocation4 + $0x90] sm:$0xff]
    %v464 = vld [vmem:[#allocation4 + $0x98] sm:$0xff]
    %v465 = vld [vmem:[#allocation4 + $0xa0] sm:$0xff]
    %v466 = vld [vmem:[#allocation4 + $0xa8] sm:$0xff]
    %v467 = vld [vmem:[#allocation4 + $0xb0] sm:$0xff]
    %v468 = vld [vmem:[#allocation4 + $0xb8] sm:$0xff]
    %v469 = vld [vmem:[#allocation4 + $0xc0] sm:$0xff]
    %v470 = vld [vmem:[#allocation4 + $0xc8] sm:$0xff]
    %v471 = vld [vmem:[#allocation4 + $0xd0] sm:$0xff]
    %v472 = vld [vmem:[#allocation4 + $0xd8] sm:$0xff]
    %v473 = vld [vmem:[#allocation4 + $0xe0] sm:$0xff]
    %v474 = vld [vmem:[#allocation4 + $0xe8] sm:$0xff]
    %v475 = vld [vmem:[#allocation4 + $0xf0] sm:$0xff]
    %v476 = vld [vmem:[#allocation4 + $0xf8] sm:$0xff]
    %v477 = vld [vmem:[%s6] sm:$0x3]
    %v479 = vlaneseq
    %v480 = vshrl.u32 %v479, 7
    %v481 = vsub.s32 0, %v480
    %v482 = vrot.slane %v477, %v481
    %v483 = vlaneseq
    %v484 = vshrl.u32 %v483, 7
    %v485 = vsub.s32 1, %v484
    %v486 = vrot.slane %v477, %v485
    %v521 = vunpack.c.l.b16 %v445
    %v522 = vunpack.c.h.b16 %v445
    %v523 = vunpack.c.l.b16 %v446
    %v524 = vunpack.c.h.b16 %v446
    %v525 = vunpack.c.l.b16 %v447
    %v526 = vunpack.c.h.b16 %v447
    %v527 = vunpack.c.l.b16 %v448
    %v528 = vunpack.c.h.b16 %v448
    %v529 = vunpack.c.l.b16 %v449
    %v530 = vunpack.c.h.b16 %v449
    %v531 = vunpack.c.l.b16 %v450
    %v532 = vunpack.c.h.b16 %v450
    %v533 = vunpack.c.l.b16 %v451
    %v534 = vunpack.c.h.b16 %v451
    %v535 = vunpack.c.l.b16 %v452
    %v536 = vunpack.c.h.b16 %v452
    %v537 = vunpack.c.l.b16 %v453
    %v538 = vunpack.c.h.b16 %v453
    %v539 = vunpack.c.l.b16 %v454
    %v540 = vunpack.c.h.b16 %v454
    %v541 = vunpack.c.l.b16 %v455
    %v542 = vunpack.c.h.b16 %v455
    %v543 = vunpack.c.l.b16 %v456
    %v544 = vunpack.c.h.b16 %v456
    %v545 = vunpack.c.l.b16 %v457
    %v546 = vunpack.c.h.b16 %v457
    %v547 = vunpack.c.l.b16 %v458
    %v548 = vunpack.c.h.b16 %v458
    %v549 = vunpack.c.l.b16 %v459
    %v550 = vunpack.c.h.b16 %v459
    %v551 = vunpack.c.l.b16 %v460
    %v552 = vunpack.c.h.b16 %v460
    %v553 = vunpack.c.l.b16 %v461
    %v554 = vunpack.c.h.b16 %v461
    %v555 = vunpack.c.l.b16 %v462
    %v556 = vunpack.c.h.b16 %v462
    %v557 = vunpack.c.l.b16 %v463
    %v558 = vunpack.c.h.b16 %v463
    %v559 = vunpack.c.l.b16 %v464
    %v560 = vunpack.c.h.b16 %v464
    %v561 = vunpack.c.l.b16 %v465
    %v562 = vunpack.c.h.b16 %v465
    %v563 = vunpack.c.l.b16 %v466
    %v564 = vunpack.c.h.b16 %v466
    %v565 = vunpack.c.l.b16 %v467
    %v566 = vunpack.c.h.b16 %v467
    %v567 = vunpack.c.l.b16 %v468
    %v568 = vunpack.c.h.b16 %v468
    %v569 = vunpack.c.l.b16 %v469
    %v570 = vunpack.c.h.b16 %v469
    %v571 = vunpack.c.l.b16 %v470
    %v572 = vunpack.c.h.b16 %v470
    %v573 = vunpack.c.l.b16 %v471
    %v574 = vunpack.c.h.b16 %v471
    %v575 = vunpack.c.l.b16 %v472
    %v576 = vunpack.c.h.b16 %v472
    %v577 = vunpack.c.l.b16 %v473
    %v578 = vunpack.c.h.b16 %v473
    %v579 = vunpack.c.l.b16 %v474
    %v580 = vunpack.c.h.b16 %v474
    %v581 = vunpack.c.l.b16 %v475
    %v582 = vunpack.c.h.b16 %v475
    %v583 = vunpack.c.l.b16 %v476
    %v584 = vunpack.c.h.b16 %v476
    %v585 = vpack.c.b16 %v523, %v521
    %v586 = vpack.c.b16 %v524, %v522
    %v587 = vpack.c.b16 %v527, %v525
    %v588 = vpack.c.b16 %v528, %v526
    %v589 = vpack.c.b16 %v531, %v529
    %v590 = vpack.c.b16 %v532, %v530
    %v591 = vpack.c.b16 %v535, %v533
    %v592 = vpack.c.b16 %v536, %v534
    %v593 = vpack.c.b16 %v539, %v537
    %v594 = vpack.c.b16 %v540, %v538
    %v595 = vpack.c.b16 %v543, %v541
    %v596 = vpack.c.b16 %v544, %v542
    %v597 = vpack.c.b16 %v547, %v545
    %v598 = vpack.c.b16 %v548, %v546
    %v599 = vpack.c.b16 %v551, %v549
    %v600 = vpack.c.b16 %v552, %v550
    %v601 = vpack.c.b16 %v555, %v553
    %v602 = vpack.c.b16 %v556, %v554
    %v603 = vpack.c.b16 %v559, %v557
    %v604 = vpack.c.b16 %v560, %v558
    %v605 = vpack.c.b16 %v563, %v561
    %v606 = vpack.c.b16 %v564, %v562
    %v607 = vpack.c.b16 %v567, %v565
    %v608 = vpack.c.b16 %v568, %v566
    %v609 = vpack.c.b16 %v571, %v569
    %v610 = vpack.c.b16 %v572, %v570
    %v611 = vpack.c.b16 %v575, %v573
    %v612 = vpack.c.b16 %v576, %v574
    %v613 = vpack.c.b16 %v579, %v577
    %v614 = vpack.c.b16 %v580, %v578
    %v615 = vpack.c.b16 %v583, %v581
    %v616 = vpack.c.b16 %v584, %v582
    %649 = vmatprep.subr.bf16.mxu0 %v586
    %650 = vmatpush1.bf16.msra.mxu0 %v585
    %651 = vmatprep.subr.bf16.mxu0 %v588
    %652 = vmatpush1.bf16.msra.mxu0 %v587
    %653 = vmatprep.subr.bf16.mxu0 %v590
    %654 = vmatpush1.bf16.msra.mxu0 %v589
    %655 = vmatprep.subr.bf16.mxu0 %v592
    %656 = vmatpush1.bf16.msra.mxu0 %v591
    %657 = vmatprep.subr.bf16.mxu0 %v594
    %658 = vmatpush1.bf16.msra.mxu0 %v593
    %659 = vmatprep.subr.bf16.mxu0 %v596
    %660 = vmatpush1.bf16.msra.mxu0 %v595
    %661 = vmatprep.subr.bf16.mxu0 %v598
    %662 = vmatpush1.bf16.msra.mxu0 %v597
    %663 = vmatprep.subr.bf16.mxu0 %v600
    %664 = vmatpush1.bf16.msra.mxu0 %v599
    %665 = vmatprep.subr.bf16.mxu0 %v602
    %666 = vmatpush1.bf16.msra.mxu0 %v601
    %667 = vmatprep.subr.bf16.mxu0 %v604
    %668 = vmatpush1.bf16.msra.mxu0 %v603
    %669 = vmatprep.subr.bf16.mxu0 %v606
    %670 = vmatpush1.bf16.msra.mxu0 %v605
    %671 = vmatprep.subr.bf16.mxu0 %v608
    %672 = vmatpush1.bf16.msra.mxu0 %v607
    %673 = vmatprep.subr.bf16.mxu0 %v610
    %674 = vmatpush1.bf16.msra.mxu0 %v609
    %675 = vmatprep.subr.bf16.mxu0 %v612
    %676 = vmatpush1.bf16.msra.mxu0 %v611
    %677 = vmatprep.subr.bf16.mxu0 %v614
    %678 = vmatpush1.bf16.msra.mxu0 %v613
    %679 = vmatprep.subr.bf16.mxu0 %v616
    %680 = vmatpush1.bf16.msra.mxu0 %v615
    %681 = vmatprep.mubr.bf16.mxu0 %v444
    %682 = vmatmul.mubr.bf16.gmra.mrb[0].mxu0 %v443
    %v683 = vpop.f32.mrb[0].mxu0
    %v684 = vadd.f32 %v482, %v683
    %v685 = vpop.f32.mrb[0].mxu0
    %v686 = vadd.f32 %v486, %v685
    %v687 = vpop.f32.mrb[0].mxu0
    %v688 = vadd.f32 %v482, %v687
    %v689 = vpop.f32.mrb[0].mxu0
    %v690 = vadd.f32 %v486, %v689
    %691 = vdwg.mxu0
    %v692 = vmax.f32 %v684, 0.0
    %v693 = vmax.f32 %v686, 0.0
    %v694 = vmax.f32 %v688, 0.0
    %v695 = vmax.f32 %v690, 0.0
    %v696 = vpack.c.bf16 %v694, %v692
    %v697 = vpack.c.bf16 %v695, %v693
    %v698 = vld [vmem:[#allocation6] sm:$0xff]
    %v699 = vld [vmem:[#allocation6 + $0x8] sm:$0xff]
    %v700 = vld [vmem:[#allocation6 + $0x10] sm:$0xff]
    %v701 = vld [vmem:[#allocation6 + $0x18] sm:$0xff]
    %v702 = vld [vmem:[#allocation6 + $0x20] sm:$0xff]
    %v703 = vld [vmem:[#allocation6 + $0x28] sm:$0xff]
    %v704 = vld [vmem:[#allocation6 + $0x30] sm:$0xff]
    %v705 = vld [vmem:[#allocation6 + $0x38] sm:$0xff]
    %v706 = vld [vmem:[#allocation6 + $0x40] sm:$0xff]
    %v707 = vld [vmem:[#allocation6 + $0x48] sm:$0xff]
    %v708 = vld [vmem:[#allocation6 + $0x50] sm:$0xff]
    %v709 = vld [vmem:[#allocation6 + $0x58] sm:$0xff]
    %v710 = vld [vmem:[#allocation6 + $0x60] sm:$0xff]
    %v711 = vld [vmem:[#allocation6 + $0x68] sm:$0xff]
    %v712 = vld [vmem:[#allocation6 + $0x70] sm:$0xff]
    %v713 = vld [vmem:[#allocation6 + $0x78] sm:$0xff]
    %v714 = vld [vmem:[#allocation6 + $0x80] sm:$0xff]
    %v715 = vld [vmem:[#allocation6 + $0x88] sm:$0xff]
    %v716 = vld [vmem:[#allocation6 + $0x90] sm:$0xff]
    %v717 = vld [vmem:[#allocation6 + $0x98] sm:$0xff]
    %v718 = vld [vmem:[#allocation6 + $0xa0] sm:$0xff]
    %v719 = vld [vmem:[#allocation6 + $0xa8] sm:$0xff]
    %v720 = vld [vmem:[#allocation6 + $0xb0] sm:$0xff]
    %v721 = vld [vmem:[#allocation6 + $0xb8] sm:$0xff]
    %v722 = vld [vmem:[#allocation6 + $0xc0] sm:$0xff]
    %v723 = vld [vmem:[#allocation6 + $0xc8] sm:$0xff]
    %v724 = vld [vmem:[#allocation6 + $0xd0] sm:$0xff]
    %v725 = vld [vmem:[#allocation6 + $0xd8] sm:$0xff]
    %v726 = vld [vmem:[#allocation6 + $0xe0] sm:$0xff]
    %v727 = vld [vmem:[#allocation6 + $0xe8] sm:$0xff]
    %v728 = vld [vmem:[#allocation6 + $0xf0] sm:$0xff]
    %v729 = vld [vmem:[#allocation6 + $0xf8] sm:$0xff]
    %v730 = vld [vmem:[%s8] sm:$0x3]
    %v732 = vlaneseq
    %v733 = vshrl.u32 %v732, 7
    %v734 = vsub.s32 0, %v733
    %v735 = vrot.slane %v730, %v734
    %v736 = vlaneseq
    %v737 = vshrl.u32 %v736, 7
    %v738 = vsub.s32 1, %v737
    %v739 = vrot.slane %v730, %v738
    %v774 = vunpack.c.l.b16 %v698
    %v775 = vunpack.c.h.b16 %v698
    %v776 = vunpack.c.l.b16 %v699
    %v777 = vunpack.c.h.b16 %v699
    %v778 = vunpack.c.l.b16 %v700
    %v779 = vunpack.c.h.b16 %v700
    %v780 = vunpack.c.l.b16 %v701
    %v781 = vunpack.c.h.b16 %v701
    %v782 = vunpack.c.l.b16 %v702
    %v783 = vunpack.c.h.b16 %v702
    %v784 = vunpack.c.l.b16 %v703
    %v785 = vunpack.c.h.b16 %v703
    %v786 = vunpack.c.l.b16 %v704
    %v787 = vunpack.c.h.b16 %v704
    %v788 = vunpack.c.l.b16 %v705
    %v789 = vunpack.c.h.b16 %v705
    %v790 = vunpack.c.l.b16 %v706
    %v791 = vunpack.c.h.b16 %v706
    %v792 = vunpack.c.l.b16 %v707
    %v793 = vunpack.c.h.b16 %v707
    %v794 = vunpack.c.l.b16 %v708
    %v795 = vunpack.c.h.b16 %v708
    %v796 = vunpack.c.l.b16 %v709
    %v797 = vunpack.c.h.b16 %v709
    %v798 = vunpack.c.l.b16 %v710
    %v799 = vunpack.c.h.b16 %v710
    %v800 = vunpack.c.l.b16 %v711
    %v801 = vunpack.c.h.b16 %v711
    %v802 = vunpack.c.l.b16 %v712
    %v803 = vunpack.c.h.b16 %v712
    %v804 = vunpack.c.l.b16 %v713
    %v805 = vunpack.c.h.b16 %v713
    %v806 = vunpack.c.l.b16 %v714
    %v807 = vunpack.c.h.b16 %v714
    %v808 = vunpack.c.l.b16 %v715
    %v809 = vunpack.c.h.b16 %v715
    %v810 = vunpack.c.l.b16 %v716
    %v811 = vunpack.c.h.b16 %v716
    %v812 = vunpack.c.l.b16 %v717
    %v813 = vunpack.c.h.b16 %v717
    %v814 = vunpack.c.l.b16 %v718
    %v815 = vunpack.c.h.b16 %v718
    %v816 = vunpack.c.l.b16 %v719
    %v817 = vunpack.c.h.b16 %v719
    %v818 = vunpack.c.l.b16 %v720
    %v819 = vunpack.c.h.b16 %v720
    %v820 = vunpack.c.l.b16 %v721
    %v821 = vunpack.c.h.b16 %v721
    %v822 = vunpack.c.l.b16 %v722
    %v823 = vunpack.c.h.b16 %v722
    %v824 = vunpack.c.l.b16 %v723
    %v825 = vunpack.c.h.b16 %v723
    %v826 = vunpack.c.l.b16 %v724
    %v827 = vunpack.c.h.b16 %v724
    %v828 = vunpack.c.l.b16 %v725
    %v829 = vunpack.c.h.b16 %v725
    %v830 = vunpack.c.l.b16 %v726
    %v831 = vunpack.c.h.b16 %v726
    %v832 = vunpack.c.l.b16 %v727
    %v833 = vunpack.c.h.b16 %v727
    %v834 = vunpack.c.l.b16 %v728
    %v835 = vunpack.c.h.b16 %v728
    %v836 = vunpack.c.l.b16 %v729
    %v837 = vunpack.c.h.b16 %v729
    %v838 = vpack.c.b16 %v776, %v774
    %v839 = vpack.c.b16 %v777, %v775
    %v840 = vpack.c.b16 %v780, %v778
    %v841 = vpack.c.b16 %v781, %v779
    %v842 = vpack.c.b16 %v784, %v782
    %v843 = vpack.c.b16 %v785, %v783
    %v844 = vpack.c.b16 %v788, %v786
    %v845 = vpack.c.b16 %v789, %v787
    %v846 = vpack.c.b16 %v792, %v790
    %v847 = vpack.c.b16 %v793, %v791
    %v848 = vpack.c.b16 %v796, %v794
    %v849 = vpack.c.b16 %v797, %v795
    %v850 = vpack.c.b16 %v800, %v798
    %v851 = vpack.c.b16 %v801, %v799
    %v852 = vpack.c.b16 %v804, %v802
    %v853 = vpack.c.b16 %v805, %v803
    %v854 = vpack.c.b16 %v808, %v806
    %v855 = vpack.c.b16 %v809, %v807
    %v856 = vpack.c.b16 %v812, %v810
    %v857 = vpack.c.b16 %v813, %v811
    %v858 = vpack.c.b16 %v816, %v814
    %v859 = vpack.c.b16 %v817, %v815
    %v860 = vpack.c.b16 %v820, %v818
    %v861 = vpack.c.b16 %v821, %v819
    %v862 = vpack.c.b16 %v824, %v822
    %v863 = vpack.c.b16 %v825, %v823
    %v864 = vpack.c.b16 %v828, %v826
    %v865 = vpack.c.b16 %v829, %v827
    %v866 = vpack.c.b16 %v832, %v830
    %v867 = vpack.c.b16 %v833, %v831
    %v868 = vpack.c.b16 %v836, %v834
    %v869 = vpack.c.b16 %v837, %v835
    %902 = vmatprep.subr.bf16.mxu0 %v839
    %903 = vmatpush1.bf16.msra.mxu0 %v838
    %904 = vmatprep.subr.bf16.mxu0 %v841
    %905 = vmatpush1.bf16.msra.mxu0 %v840
    %906 = vmatprep.subr.bf16.mxu0 %v843
    %907 = vmatpush1.bf16.msra.mxu0 %v842
    %908 = vmatprep.subr.bf16.mxu0 %v845
    %909 = vmatpush1.bf16.msra.mxu0 %v844
    %910 = vmatprep.subr.bf16.mxu0 %v847
    %911 = vmatpush1.bf16.msra.mxu0 %v846
    %912 = vmatprep.subr.bf16.mxu0 %v849
    %913 = vmatpush1.bf16.msra.mxu0 %v848
    %914 = vmatprep.subr.bf16.mxu0 %v851
    %915 = vmatpush1.bf16.msra.mxu0 %v850
    %916 = vmatprep.subr.bf16.mxu0 %v853
    %917 = vmatpush1.bf16.msra.mxu0 %v852
    %918 = vmatprep.subr.bf16.mxu0 %v855
    %919 = vmatpush1.bf16.msra.mxu0 %v854
    %920 = vmatprep.subr.bf16.mxu0 %v857
    %921 = vmatpush1.bf16.msra.mxu0 %v856
    %922 = vmatprep.subr.bf16.mxu0 %v859
    %923 = vmatpush1.bf16.msra.mxu0 %v858
    %924 = vmatprep.subr.bf16.mxu0 %v861
    %925 = vmatpush1.bf16.msra.mxu0 %v860
    %926 = vmatprep.subr.bf16.mxu0 %v863
    %927 = vmatpush1.bf16.msra.mxu0 %v862
    %928 = vmatprep.subr.bf16.mxu0 %v865
    %929 = vmatpush1.bf16.msra.mxu0 %v864
    %930 = vmatprep.subr.bf16.mxu0 %v867
    %931 = vmatpush1.bf16.msra.mxu0 %v866
    %932 = vmatprep.subr.bf16.mxu0 %v869
    %933 = vmatpush1.bf16.msra.mxu0 %v868
    %934 = vmatprep.mubr.bf16.mxu0 %v697
    %935 = vmatmul.mubr.bf16.gmra.mrb[0].mxu0 %v696
    %v936 = vpop.f32.mrb[0].mxu0
    %v937 = vadd.f32 %v735, %v936
    %v938 = vpop.f32.mrb[0].mxu0
    %v939 = vadd.f32 %v739, %v938
    %v940 = vpop.f32.mrb[0].mxu0
    %v941 = vadd.f32 %v735, %v940
    %v942 = vpop.f32.mrb[0].mxu0
    %v943 = vadd.f32 %v739, %v942
    %944 = vdwg.mxu0
    %v945 = vmax.f32 %v937, 0.0
    %v946 = vmax.f32 %v939, 0.0
    %v947 = vmax.f32 %v941, 0.0
    %v948 = vmax.f32 %v943, 0.0
    %v949 = vpack.c.bf16 %v947, %v945
    %v950 = vpack.c.bf16 %v948, %v946
    %v951 = vld [vmem:[#allocation7] sm:$0xff]
    %v952 = vld [vmem:[#allocation7 + $0x8] sm:$0xff]
    %v953 = vld [vmem:[#allocation7 + $0x10] sm:$0xff]
    %v954 = vld [vmem:[#allocation7 + $0x18] sm:$0xff]
    %v955 = vld [vmem:[#allocation7 + $0x20] sm:$0xff]
    %v956 = vld [vmem:[#allocation7 + $0x28] sm:$0xff]
    %v957 = vld [vmem:[#allocation7 + $0x30] sm:$0xff]
    %v958 = vld [vmem:[#allocation7 + $0x38] sm:$0xff]
    %v959 = vld [vmem:[#allocation7 + $0x40] sm:$0xff]
    %v960 = vld [vmem:[#allocation7 + $0x48] sm:$0xff]
    %v961 = vld [vmem:[#allocation7 + $0x50] sm:$0xff]
    %v962 = vld [vmem:[#allocation7 + $0x58] sm:$0xff]
    %v963 = vld [vmem:[#allocation7 + $0x60] sm:$0xff]
    %v964 = vld [vmem:[#allocation7 + $0x68] sm:$0xff]
    %v965 = vld [vmem:[#allocation7 + $0x70] sm:$0xff]
    %v966 = vld [vmem:[#allocation7 + $0x78] sm:$0xff]
    %v967 = vld [vmem:[#allocation7 + $0x80] sm:$0xff]
    %v968 = vld [vmem:[#allocation7 + $0x88] sm:$0xff]
    %v969 = vld [vmem:[#allocation7 + $0x90] sm:$0xff]
    %v970 = vld [vmem:[#allocation7 + $0x98] sm:$0xff]
    %v971 = vld [vmem:[#allocation7 + $0xa0] sm:$0xff]
    %v972 = vld [vmem:[#allocation7 + $0xa8] sm:$0xff]
    %v973 = vld [vmem:[#allocation7 + $0xb0] sm:$0xff]
    %v974 = vld [vmem:[#allocation7 + $0xb8] sm:$0xff]
    %v975 = vld [vmem:[#allocation7 + $0xc0] sm:$0xff]
    %v976 = vld [vmem:[#allocation7 + $0xc8] sm:$0xff]
    %v977 = vld [vmem:[#allocation7 + $0xd0] sm:$0xff]
    %v978 = vld [vmem:[#allocation7 + $0xd8] sm:$0xff]
    %v979 = vld [vmem:[#allocation7 + $0xe0] sm:$0xff]
    %v980 = vld [vmem:[#allocation7 + $0xe8] sm:$0xff]
    %v981 = vld [vmem:[#allocation7 + $0xf0] sm:$0xff]
    %v982 = vld [vmem:[#allocation7 + $0xf8] sm:$0xff]
    %v983 = vld [vmem:[%s10] sm:$0x3]
    %v985 = vlaneseq
    %v986 = vshrl.u32 %v985, 7
    %v987 = vsub.s32 0, %v986
    %v988 = vrot.slane %v983, %v987
    %v989 = vlaneseq
    %v990 = vshrl.u32 %v989, 7
    %v991 = vsub.s32 1, %v990
    %v992 = vrot.slane %v983, %v991
    %v1027 = vunpack.c.l.b16 %v951
    %v1028 = vunpack.c.h.b16 %v951
    %v1029 = vunpack.c.l.b16 %v952
    %v1030 = vunpack.c.h.b16 %v952
    %v1031 = vunpack.c.l.b16 %v953
    %v1032 = vunpack.c.h.b16 %v953
    %v1033 = vunpack.c.l.b16 %v954
    %v1034 = vunpack.c.h.b16 %v954
    %v1035 = vunpack.c.l.b16 %v955
    %v1036 = vunpack.c.h.b16 %v955
    %v1037 = vunpack.c.l.b16 %v956
    %v1038 = vunpack.c.h.b16 %v956
    %v1039 = vunpack.c.l.b16 %v957
    %v1040 = vunpack.c.h.b16 %v957
    %v1041 = vunpack.c.l.b16 %v958
    %v1042 = vunpack.c.h.b16 %v958
    %v1043 = vunpack.c.l.b16 %v959
    %v1044 = vunpack.c.h.b16 %v959
    %v1045 = vunpack.c.l.b16 %v960
    %v1046 = vunpack.c.h.b16 %v960
    %v1047 = vunpack.c.l.b16 %v961
    %v1048 = vunpack.c.h.b16 %v961
    %v1049 = vunpack.c.l.b16 %v962
    %v1050 = vunpack.c.h.b16 %v962
    %v1051 = vunpack.c.l.b16 %v963
    %v1052 = vunpack.c.h.b16 %v963
    %v1053 = vunpack.c.l.b16 %v964
    %v1054 = vunpack.c.h.b16 %v964
    %v1055 = vunpack.c.l.b16 %v965
    %v1056 = vunpack.c.h.b16 %v965
    %v1057 = vunpack.c.l.b16 %v966
    %v1058 = vunpack.c.h.b16 %v966
    %v1059 = vunpack.c.l.b16 %v967
    %v1060 = vunpack.c.h.b16 %v967
    %v1061 = vunpack.c.l.b16 %v968
    %v1062 = vunpack.c.h.b16 %v968
    %v1063 = vunpack.c.l.b16 %v969
    %v1064 = vunpack.c.h.b16 %v969
    %v1065 = vunpack.c.l.b16 %v970
    %v1066 = vunpack.c.h.b16 %v970
    %v1067 = vunpack.c.l.b16 %v971
    %v1068 = vunpack.c.h.b16 %v971
    %v1069 = vunpack.c.l.b16 %v972
    %v1070 = vunpack.c.h.b16 %v972
    %v1071 = vunpack.c.l.b16 %v973
    %v1072 = vunpack.c.h.b16 %v973
    %v1073 = vunpack.c.l.b16 %v974
    %v1074 = vunpack.c.h.b16 %v974
    %v1075 = vunpack.c.l.b16 %v975
    %v1076 = vunpack.c.h.b16 %v975
    %v1077 = vunpack.c.l.b16 %v976
    %v1078 = vunpack.c.h.b16 %v976
    %v1079 = vunpack.c.l.b16 %v977
    %v1080 = vunpack.c.h.b16 %v977
    %v1081 = vunpack.c.l.b16 %v978
    %v1082 = vunpack.c.h.b16 %v978
    %v1083 = vunpack.c.l.b16 %v979
    %v1084 = vunpack.c.h.b16 %v979
    %v1085 = vunpack.c.l.b16 %v980
    %v1086 = vunpack.c.h.b16 %v980
    %v1087 = vunpack.c.l.b16 %v981
    %v1088 = vunpack.c.h.b16 %v981
    %v1089 = vunpack.c.l.b16 %v982
    %v1090 = vunpack.c.h.b16 %v982
    %v1091 = vpack.c.b16 %v1029, %v1027
    %v1092 = vpack.c.b16 %v1030, %v1028
    %v1093 = vpack.c.b16 %v1033, %v1031
    %v1094 = vpack.c.b16 %v1034, %v1032
    %v1095 = vpack.c.b16 %v1037, %v1035
    %v1096 = vpack.c.b16 %v1038, %v1036
    %v1097 = vpack.c.b16 %v1041, %v1039
    %v1098 = vpack.c.b16 %v1042, %v1040
    %v1099 = vpack.c.b16 %v1045, %v1043
    %v1100 = vpack.c.b16 %v1046, %v1044
    %v1101 = vpack.c.b16 %v1049, %v1047
    %v1102 = vpack.c.b16 %v1050, %v1048
    %v1103 = vpack.c.b16 %v1053, %v1051
    %v1104 = vpack.c.b16 %v1054, %v1052
    %v1105 = vpack.c.b16 %v1057, %v1055
    %v1106 = vpack.c.b16 %v1058, %v1056
    %v1107 = vpack.c.b16 %v1061, %v1059
    %v1108 = vpack.c.b16 %v1062, %v1060
    %v1109 = vpack.c.b16 %v1065, %v1063
    %v1110 = vpack.c.b16 %v1066, %v1064
    %v1111 = vpack.c.b16 %v1069, %v1067
    %v1112 = vpack.c.b16 %v1070, %v1068
    %v1113 = vpack.c.b16 %v1073, %v1071
    %v1114 = vpack.c.b16 %v1074, %v1072
    %v1115 = vpack.c.b16 %v1077, %v1075
    %v1116 = vpack.c.b16 %v1078, %v1076
    %v1117 = vpack.c.b16 %v1081, %v1079
    %v1118 = vpack.c.b16 %v1082, %v1080
    %v1119 = vpack.c.b16 %v1085, %v1083
    %v1120 = vpack.c.b16 %v1086, %v1084
    %v1121 = vpack.c.b16 %v1089, %v1087
    %v1122 = vpack.c.b16 %v1090, %v1088
    %1155 = vmatprep.subr.bf16.mxu0 %v1092
    %1156 = vmatpush1.bf16.msra.mxu0 %v1091
    %1157 = vmatprep.subr.bf16.mxu0 %v1094
    %1158 = vmatpush1.bf16.msra.mxu0 %v1093
    %1159 = vmatprep.subr.bf16.mxu0 %v1096
    %1160 = vmatpush1.bf16.msra.mxu0 %v1095
    %1161 = vmatprep.subr.bf16.mxu0 %v1098
    %1162 = vmatpush1.bf16.msra.mxu0 %v1097
    %1163 = vmatprep.subr.bf16.mxu0 %v1100
    %1164 = vmatpush1.bf16.msra.mxu0 %v1099
    %1165 = vmatprep.subr.bf16.mxu0 %v1102
    %1166 = vmatpush1.bf16.msra.mxu0 %v1101
    %1167 = vmatprep.subr.bf16.mxu0 %v1104
    %1168 = vmatpush1.bf16.msra.mxu0 %v1103
    %1169 = vmatprep.subr.bf16.mxu0 %v1106
    %1170 = vmatpush1.bf16.msra.mxu0 %v1105
    %1171 = vmatprep.subr.bf16.mxu0 %v1108
    %1172 = vmatpush1.bf16.msra.mxu0 %v1107
    %1173 = vmatprep.subr.bf16.mxu0 %v1110
    %1174 = vmatpush1.bf16.msra.mxu0 %v1109
    %1175 = vmatprep.subr.bf16.mxu0 %v1112
    %1176 = vmatpush1.bf16.msra.mxu0 %v1111
    %1177 = vmatprep.subr.bf16.mxu0 %v1114
    %1178 = vmatpush1.bf16.msra.mxu0 %v1113
    %1179 = vmatprep.subr.bf16.mxu0 %v1116
    %1180 = vmatpush1.bf16.msra.mxu0 %v1115
    %1181 = vmatprep.subr.bf16.mxu0 %v1118
    %1182 = vmatpush1.bf16.msra.mxu0 %v1117
    %1183 = vmatprep.subr.bf16.mxu0 %v1120
    %1184 = vmatpush1.bf16.msra.mxu0 %v1119
    %1185 = vmatprep.subr.bf16.mxu0 %v1122
    %1186 = vmatpush1.bf16.msra.mxu0 %v1121
    %1187 = vmatprep.mubr.bf16.mxu0 %v950
    %1188 = vmatmul.mubr.bf16.gmra.mrb[0].mxu0 %v949
    %v1189 = vpop.f32.mrb[0].mxu0
    %v1190 = vadd.f32 %v988, %v1189
    %v1191 = vpop.f32.mrb[0].mxu0
    %v1192 = vadd.f32 %v992, %v1191
    %v1193 = vpop.f32.mrb[0].mxu0
    %v1194 = vadd.f32 %v988, %v1193
    %v1195 = vpop.f32.mrb[0].mxu0
    %v1196 = vadd.f32 %v992, %v1195
    %1197 = vdwg.mxu0
    %v1198 = vmax.f32 %v1190, 0.0
    %v1199 = vmax.f32 %v1192, 0.0
    %v1200 = vmax.f32 %v1194, 0.0
    %v1201 = vmax.f32 %v1196, 0.0
    %v1202 = vpack.c.bf16 %v1200, %v1198
    %v1203 = vpack.c.bf16 %v1201, %v1199
    %v1204 = vld [vmem:[%s11] sm:$0xf]
    %v1205 = vld [vmem:[%s11 + $0x4] sm:$0xf]
    %v1206 = vld [vmem:[%s11 + $0x8] sm:$0xf]
    %v1207 = vld [vmem:[%s11 + $0xc] sm:$0xf]
    %v1208 = vld [vmem:[%s11 + $0x10] sm:$0xf]
    %v1209 = vld [vmem:[%s11 + $0x14] sm:$0xf]
    %v1210 = vld [vmem:[%s11 + $0x18] sm:$0xf]
    %v1211 = vld [vmem:[%s11 + $0x1c] sm:$0xf]
    %v1212 = vld [vmem:[%s11 + $0x20] sm:$0xf]
    %v1213 = vld [vmem:[%s11 + $0x24] sm:$0xf]
    %v1214 = vld [vmem:[%s11 + $0x28] sm:$0xf]
    %v1215 = vld [vmem:[%s11 + $0x2c] sm:$0xf]
    %v1216 = vld [vmem:[%s11 + $0x30] sm:$0xf]
    %v1217 = vld [vmem:[%s11 + $0x34] sm:$0xf]
    %v1218 = vld [vmem:[%s11 + $0x38] sm:$0xf]
    %v1219 = vld [vmem:[%s11 + $0x3c] sm:$0xf]
    %v1220 = vld [vmem:[%s11 + $0x40] sm:$0xf]
    %v1221 = vld [vmem:[%s11 + $0x44] sm:$0xf]
    %v1222 = vld [vmem:[%s11 + $0x48] sm:$0xf]
    %v1223 = vld [vmem:[%s11 + $0x4c] sm:$0xf]
    %v1224 = vld [vmem:[%s11 + $0x50] sm:$0xf]
    %v1225 = vld [vmem:[%s11 + $0x54] sm:$0xf]
    %v1226 = vld [vmem:[%s11 + $0x58] sm:$0xf]
    %v1227 = vld [vmem:[%s11 + $0x5c] sm:$0xf]
    %v1228 = vld [vmem:[%s11 + $0x60] sm:$0xf]
    %v1229 = vld [vmem:[%s11 + $0x64] sm:$0xf]
    %v1230 = vld [vmem:[%s11 + $0x68] sm:$0xf]
    %v1231 = vld [vmem:[%s11 + $0x6c] sm:$0xf]
    %v1232 = vld [vmem:[%s11 + $0x70] sm:$0xf]
    %v1233 = vld [vmem:[%s11 + $0x74] sm:$0xf]
    %v1234 = vld [vmem:[%s11 + $0x78] sm:$0xf]
    %v1235 = vld [vmem:[%s11 + $0x7c] sm:$0xf]
    %v1236 = vld [vmem:[%s12] sm:$0x1]
    %v1238 = vlaneseq
    %v1239 = vshrl.u32 %v1238, 7
    %v1240 = vsub.s32 0, %v1239
    %v1241 = vrot.slane %v1236, %v1240
    %v1275 = vunpack.c.l.b16 %v1204
    %v1276 = vunpack.c.l.b16 %v1205
    %v1277 = vunpack.c.l.b16 %v1206
    %v1278 = vunpack.c.l.b16 %v1207
    %v1279 = vunpack.c.l.b16 %v1208
    %v1280 = vunpack.c.l.b16 %v1209
    %v1281 = vunpack.c.l.b16 %v1210
    %v1282 = vunpack.c.l.b16 %v1211
    %v1283 = vunpack.c.l.b16 %v1212
    %v1284 = vunpack.c.l.b16 %v1213
    %v1285 = vunpack.c.l.b16 %v1214
    %v1286 = vunpack.c.l.b16 %v1215
    %v1287 = vunpack.c.l.b16 %v1216
    %v1288 = vunpack.c.l.b16 %v1217
    %v1289 = vunpack.c.l.b16 %v1218
    %v1290 = vunpack.c.l.b16 %v1219
    %v1291 = vunpack.c.l.b16 %v1220
    %v1292 = vunpack.c.l.b16 %v1221
    %v1293 = vunpack.c.l.b16 %v1222
    %v1294 = vunpack.c.l.b16 %v1223
    %v1295 = vunpack.c.l.b16 %v1224
    %v1296 = vunpack.c.l.b16 %v1225
    %v1297 = vunpack.c.l.b16 %v1226
    %v1298 = vunpack.c.l.b16 %v1227
    %v1299 = vunpack.c.l.b16 %v1228
    %v1300 = vunpack.c.l.b16 %v1229
    %v1301 = vunpack.c.l.b16 %v1230
    %v1302 = vunpack.c.l.b16 %v1231
    %v1303 = vunpack.c.l.b16 %v1232
    %v1304 = vunpack.c.l.b16 %v1233
    %v1305 = vunpack.c.l.b16 %v1234
    %v1306 = vunpack.c.l.b16 %v1235
    %v1307 = vpack.c.b16 %v1276, %v1275
    %v1308 = vpack.c.b16 %v1278, %v1277
    %v1309 = vpack.c.b16 %v1280, %v1279
    %v1310 = vpack.c.b16 %v1282, %v1281
    %v1311 = vpack.c.b16 %v1284, %v1283
    %v1312 = vpack.c.b16 %v1286, %v1285
    %v1313 = vpack.c.b16 %v1288, %v1287
    %v1314 = vpack.c.b16 %v1290, %v1289
    %v1315 = vpack.c.b16 %v1292, %v1291
    %v1316 = vpack.c.b16 %v1294, %v1293
    %v1317 = vpack.c.b16 %v1296, %v1295
    %v1318 = vpack.c.b16 %v1298, %v1297
    %v1319 = vpack.c.b16 %v1300, %v1299
    %v1320 = vpack.c.b16 %v1302, %v1301
    %v1321 = vpack.c.b16 %v1304, %v1303
    %v1322 = vpack.c.b16 %v1306, %v1305
    %1339 = vmatprep.subr.bf16.mxu0 0
    %1340 = vmatpush1.bf16.msra.mxu0 %v1307
    %1341 = vmatprep.subr.bf16.mxu0 0
    %1342 = vmatpush1.bf16.msra.mxu0 %v1308
    %1343 = vmatprep.subr.bf16.mxu0 0
    %1344 = vmatpush1.bf16.msra.mxu0 %v1309
    %1345 = vmatprep.subr.bf16.mxu0 0
    %1346 = vmatpush1.bf16.msra.mxu0 %v1310
    %1347 = vmatprep.subr.bf16.mxu0 0
    %1348 = vmatpush1.bf16.msra.mxu0 %v1311
    %1349 = vmatprep.subr.bf16.mxu0 0
    %1350 = vmatpush1.bf16.msra.mxu0 %v1312
    %1351 = vmatprep.subr.bf16.mxu0 0
    %1352 = vmatpush1.bf16.msra.mxu0 %v1313
    %1353 = vmatprep.subr.bf16.mxu0 0
    %1354 = vmatpush1.bf16.msra.mxu0 %v1314
    %1355 = vmatprep.subr.bf16.mxu0 0
    %1356 = vmatpush1.bf16.msra.mxu0 %v1315
    %1357 = vmatprep.subr.bf16.mxu0 0
    %1358 = vmatpush1.bf16.msra.mxu0 %v1316
    %1359 = vmatprep.subr.bf16.mxu0 0
    %1360 = vmatpush1.bf16.msra.mxu0 %v1317
    %1361 = vmatprep.subr.bf16.mxu0 0
    %1362 = vmatpush1.bf16.msra.mxu0 %v1318
    %1363 = vmatprep.subr.bf16.mxu0 0
    %1364 = vmatpush1.bf16.msra.mxu0 %v1319
    %1365 = vmatprep.subr.bf16.mxu0 0
    %1366 = vmatpush1.bf16.msra.mxu0 %v1320
    %1367 = vmatprep.subr.bf16.mxu0 0
    %1368 = vmatpush1.bf16.msra.mxu0 %v1321
    %1369 = vmatprep.subr.bf16.mxu0 0
    %1370 = vmatpush1.bf16.msra.mxu0 %v1322
    %1371 = vmatprep.mubr.bf16.mxu0 %v1203
    %1372 = vmatmul.mubr.bf16.gmra.mrb[0].mxu0 %v1202
    %v1373 = vpop.f32.mrb[0].mxu0
    %v1374 = vadd.f32 %v1241, %v1373
    %v1375 = vpop.f32.mrb[0].mxu0
    %v1376 = vpop.f32.mrb[0].mxu0
    %v1377 = vadd.f32 %v1241, %v1376
    %v1378 = vpop.f32.mrb[0].mxu0
    %1379 = vdwg.mxu0
    %vm1380 = vcmask 64512
    %1381 = vst.msk [vmem:[%s13] sm:$0xff] %vm1380, %v1374
    %1382 = vst.msk [vmem:[%s13 + $0x8] sm:$0xff] %vm1380, %v1377
    // Predicated region
    $region70: #{simple_nn_forward.1} parent=1 // pred_check
      _
    $region71: #{simple_nn_forward.1} parent=1 // pred_check_branch
      %1384 = sbr.rel (0) target = $region73
    $region72: #{simple_nn_forward.1} parent=1 // pred_region
      _
    $region73: #{simple_nn_forward.1} parent=1 // pred_fallthru
      _
    // Predicated region
    $region74: #{simple_nn_forward.1} parent=1 // pred_check
      _
    $region75: #{simple_nn_forward.1} parent=1 // pred_check_branch
      %1386 = sbr.rel (0) target = $region77
    $region76: #{simple_nn_forward.1} parent=1 // pred_region
      _
    $region77: #{simple_nn_forward.1} parent=1 // pred_fallthru
      _
    %1387 = vsyncpa [#allocation3], 1
    %1388 = vsyncpa [#allocation5], 1
    %1389 = vsyncpa [#allocation8], 1

</llo_original>
